<compile_context>
chip_gen: v7x
topology: tpu7x:2x2x1
jax: 0.10.0
libtpu: 0.0.40
codegen_flags: <defaults>
</compile_context>

<pallas_src>
import jax
import jax.numpy as jnp
from jax.experimental import pallas as pl
from jax.experimental.pallas import tpu as pltpu


def _round_up(n: int, m: int) -> int:
    return ((n + m - 1) // m) * m


def quad_kernel(coef_ref, xt_ref, o_ref):
    """out = a00*x0^2 + a11*x1^2 + a01_2*x0*x1 + c0*x0 + c1*x1 + d.

    coef_ref : SMEM (6,) f32  -> [a00, a11, 2*a01, c0, c1, d]
    xt_ref   : VMEM (2, TB)   -> row 0 = x0 (lane-dense), row 1 = x1
    o_ref    : VMEM (1, TB)   -> lane-dense output row
    """
    x0 = xt_ref[0:1, :]
    x1 = xt_ref[1:2, :]
    a00 = coef_ref[0]
    a11 = coef_ref[1]
    a01_2 = coef_ref[2]
    c0 = coef_ref[3]
    c1 = coef_ref[4]
    d = coef_ref[5]
    out = x0 * (a00 * x0 + a01_2 * x1 + c0) + x1 * (a11 * x1 + c1) + d
    o_ref[...] = out.astype(o_ref.dtype)


def mlp_forward(x, w1, b1, w2, b2, *, tile_b: int = 8192):
    """x: (B, 2). Params in PyTorch nn.Linear layout:
       w1 (36, 2), b1 (36,), w2 (1, 36), b2 (1,)."""
    B = x.shape[0]

    # ---- exact fold: Linear(2,36) -> **2 -> Linear(36,1) => quadratic form ----
    w1t = w1.T.astype(jnp.float32)                    # (2, 36)
    w2v = w2.reshape(-1).astype(jnp.float32)          # (36,)
    b1f = b1.astype(jnp.float32)                      # (36,)
    A = (w1t * w2v[None, :]) @ w1t.T                  # (2, 2) = W1^T diag(w2) W1
    c = 2.0 * (w1t @ (w2v * b1f))                     # (2,)
    d = jnp.sum(w2v * b1f * b1f) + b2.reshape(())     # scalar
    coef = jnp.stack([A[0, 0], A[1, 1], A[0, 1] + A[1, 0], c[0], c[1], d])
    coef = coef.astype(jnp.float32)                   # (6,)

    # ---- lane-dense layout: x -> (2, B_pad), out -> (1, B_pad) ----
    tb = min(tile_b, _round_up(B, 128))
    tb = _round_up(tb, 128)
    b_pad = _round_up(B, tb)
    xt = x.astype(jnp.float32).T                      # (2, B)
    if b_pad != B:
        xt = jnp.pad(xt, ((0, 0), (0, b_pad - B)))    # (2, B_pad)

    out_row = pl.pallas_call(
        quad_kernel,
        out_shape=jax.ShapeDtypeStruct((1, b_pad), jnp.float32),
        grid=(b_pad // tb,),
        in_specs=[
            # 6 folded scalars: whole array, SMEM-resident (no VMEM broadcast).
            pl.BlockSpec(memory_space=pltpu.MemorySpace.SMEM),
            # batch tile of the transposed input, lane-dense.
            pl.BlockSpec((2, tb), lambda i: (0, i)),
        ],
        out_specs=pl.BlockSpec((1, tb), lambda i: (0, i)),
        compiler_params=pltpu.CompilerParams(
            dimension_semantics=("parallel",)),
    )(coef, xt)

    return out_row[0, :B].reshape(B, 1).astype(x.dtype)


def init_params(key):
    """Deterministic init matching nn.Linear shapes / default init:
       linear1: weight (36, 2), bias (36,)
       linear2: weight (1, 36), bias (1,)"""
    k1, k2, k3, k4 = jax.random.split(key, 4)
    bound1 = 1.0 / jnp.sqrt(2.0)
    bound2 = 1.0 / jnp.sqrt(36.0)
    w1 = jax.random.uniform(k1, (36, 2), jnp.float32, -bound1, bound1)
    b1 = jax.random.uniform(k2, (36,), jnp.float32, -bound1, bound1)
    w2 = jax.random.uniform(k3, (1, 36), jnp.float32, -bound2, bound2)
    b2 = jax.random.uniform(k4, (1,), jnp.float32, -bound2, bound2)
    return w1, b1, w2, b2


if __name__ == "__main__":
    key = jax.random.PRNGKey(0)
    kx, kp = jax.random.split(key)

    B = 8  # small demo batch; wrapper pads/tiles to 128-aligned lanes
    x = jax.random.normal(kx, (B, 2), jnp.float32)
    w1, b1, w2, b2 = init_params(kp)

    fwd = jax.jit(mlp_forward)
    out = fwd(x, w1, b1, w2, b2)
    jax.block_until_ready(out)

    # Reference: exact module semantics in plain JAX.
    ref = ((x @ w1.T + b1) ** 2) @ w2.T + b2
    assert out.shape == (B, 1)
    assert jnp.allclose(out, ref, atol=1e-4, rtol=1e-4), (
        float(jnp.max(jnp.abs(out - ref))))

    print("KERNEL_OK")
</pallas_src>

<mosaic_0001>
module attributes {stable_mosaic.version = 11 : i64} {
  func.func @quad_kernel(%arg0: i32, %arg1: memref<6xf32, #tpu.memory_space<smem>>, %arg2: memref<2x128xf32, #tpu.memory_space<vmem>>, %arg3: memref<1x128xf32, #tpu.memory_space<vmem>>) attributes {dimension_semantics = [#tpu.dimension_semantics<parallel>], iteration_bounds = array<i64: 1>, scalar_prefetch = 0 : i64, scratch_operands = 0 : i64, tpu.core_type = #tpu.core_type<tc>, window_params = [{transform_indices = @transform_0, window_bounds = array<i64: 6>}, {transform_indices = @transform_1, window_bounds = array<i64: 2, 128>}, {transform_indices = @transform_2, window_bounds = array<i64: 1, 128>}]} {
    %c0 = arith.constant 0 : index
    %c0_0 = arith.constant 0 : index
    %0 = vector.load %arg2[%c0, %c0_0] : memref<2x128xf32, #tpu.memory_space<vmem>>, vector<1x128xf32>
    %c1 = arith.constant 1 : index
    %c0_1 = arith.constant 0 : index
    %1 = vector.load %arg2[%c1, %c0_1] : memref<2x128xf32, #tpu.memory_space<vmem>>, vector<1x128xf32>
    %c0_2 = arith.constant 0 : index
    %2 = memref.load %arg1[%c0_2] : memref<6xf32, #tpu.memory_space<smem>>
    %c1_3 = arith.constant 1 : index
    %3 = memref.load %arg1[%c1_3] : memref<6xf32, #tpu.memory_space<smem>>
    %c2 = arith.constant 2 : index
    %4 = memref.load %arg1[%c2] : memref<6xf32, #tpu.memory_space<smem>>
    %c3 = arith.constant 3 : index
    %5 = memref.load %arg1[%c3] : memref<6xf32, #tpu.memory_space<smem>>
    %c4 = arith.constant 4 : index
    %6 = memref.load %arg1[%c4] : memref<6xf32, #tpu.memory_space<smem>>
    %c5 = arith.constant 5 : index
    %7 = memref.load %arg1[%c5] : memref<6xf32, #tpu.memory_space<smem>>
    %8 = vector.broadcast %2 : f32 to vector<1x128xf32>
    %9 = arith.mulf %8, %0 : vector<1x128xf32>
    %10 = vector.broadcast %4 : f32 to vector<1x128xf32>
    %11 = arith.mulf %10, %1 : vector<1x128xf32>
    %12 = arith.addf %9, %11 : vector<1x128xf32>
    %13 = vector.broadcast %5 : f32 to vector<1x128xf32>
    %14 = arith.addf %12, %13 : vector<1x128xf32>
    %15 = arith.mulf %0, %14 : vector<1x128xf32>
    %16 = vector.broadcast %3 : f32 to vector<1x128xf32>
    %17 = arith.mulf %16, %1 : vector<1x128xf32>
    %18 = vector.broadcast %6 : f32 to vector<1x128xf32>
    %19 = arith.addf %17, %18 : vector<1x128xf32>
    %20 = arith.mulf %1, %19 : vector<1x128xf32>
    %21 = arith.addf %15, %20 : vector<1x128xf32>
    %22 = vector.broadcast %7 : f32 to vector<1x128xf32>
    %23 = arith.addf %21, %22 : vector<1x128xf32>
    %c0_4 = arith.constant 0 : index
    %c0_5 = arith.constant 0 : index
    %24 = vector.load %arg3[%c0_4, %c0_5] : memref<1x128xf32, #tpu.memory_space<vmem>>, vector<1x128xf32>
    tpu.vector_store %arg3[%c0_4, %c0_5], %23 {strides = array<i32>} : memref<1x128xf32, #tpu.memory_space<vmem>>, vector<1x128xf32>,
    return
  }
  func.func @transform_0(%arg0: i32) -> i32 {
    %c0_i32 = arith.constant 0 : i32
    %c0_i32_0 = arith.constant 0 : i32
    return %c0_i32 : i32
  }
  func.func @transform_1(%arg0: i32) -> (i32, i32) {
    %c0_i32 = arith.constant 0 : i32
    %c0_i32_0 = arith.constant 0 : i32
    return %c0_i32, %arg0 : i32, i32
  }
  func.func @transform_2(%arg0: i32) -> (i32, i32) {
    %c0_i32 = arith.constant 0 : i32
    %c0_i32_0 = arith.constant 0 : i32
    return %c0_i32, %arg0 : i32, i32
  }
}

</mosaic_0001>

<llo_original>
// kernel: mlp_forward.1
$region0: #{mlp_forward.1}
  #allocation0 [shape = 'u32[]', space=smem, size = 0x4, offset = 0x4, fixed_abs, tag = 'smem constant byte address 0x4 - core index']
  #allocation1 [shape = 'u32[144,128]{1,0:T(1,128)}', space=vmem, size = 0x12000, scoped, tag = 'internal scratch']
  %s0 = inlined_call_operand.vmem [shape: f32[6], index: 0, kind: input, shape index: {}]
  %s1 = inlined_call_operand.vmem [shape: f32[2,128], index: 1, kind: input, shape index: {}]
  %s2 = inlined_call_operand.vmem [shape: f32[1,128], index: 2, kind: output, shape index: {}]
  %s3 = sld [smem:[#allocation0]]
  $region22: #{mlp_forward.1} parent=0
    _
  %s5 = ssub.s32 1, %s3
  %s6 = scalar_select 0, %s5, %s3
  $region1: #{mlp_forward.1} parent=0
    #allocation2 [shape = 'u8[512]{0}', space=smem, size = 0x200, scoped, tag = 'input window, operand 0, single buffered']
    #allocation3 [shape = 's32[1]{0}', space=sflag, size = 0x4, scoped, tag = 'scoped memory for mlp_forward.1']
    %7 = vsyncpa [#allocation3], 0
    // Predicated region
    $region2: #{mlp_forward.1} parent=1 // pred_check
      _
    $region3: #{mlp_forward.1} parent=1 // pred_check_branch
      %9 = sbr.rel (0) target = $region5
    $region4: #{mlp_forward.1} parent=1 // pred_region
      %s11 = ssub.s32 16, 16
      %12 = vsyncadd [#allocation3], %s11
      %s14 = sshll.u32 %s0, 4
      %s15 = int_to_ptr.vmem [resolvable:$true] %s14
      %17 = dma.vmem_to_smem %s15, 16, [#allocation2], [#allocation3]
    $region5: #{mlp_forward.1} parent=1 // pred_fallthru
      _
    // Predicated region
    $region6: #{mlp_forward.1} parent=1 // pred_check
      _
    $region7: #{mlp_forward.1} parent=1 // pred_check_branch
      %19 = sbr.rel (0) target = $region9
    $region8: #{mlp_forward.1} parent=1 // pred_region
      _
    $region9: #{mlp_forward.1} parent=1 // pred_fallthru
      _
    // Predicated region
    $region10: #{mlp_forward.1} parent=1 // pred_check
      _
    $region11: #{mlp_forward.1} parent=1 // pred_check_branch
      %21 = sbr.rel (0) target = $region13
    $region12: #{mlp_forward.1} parent=1 // pred_region
      %22 = dma.done [#allocation3], 16
    $region13: #{mlp_forward.1} parent=1 // pred_fallthru
      _
    %23 = sfence
    %v24 = vld [vmem:[%s1] sm:$0x1]
    %v25 = vld [vmem:[%s1 + $0x1] sm:$0x1]
    %s26 = sld [smem:[#allocation2]]
    %s27 = sld [smem:[#allocation2 + $0x1]]
    %s28 = sld [smem:[#allocation2 + $0x2]]
    %s29 = sld [smem:[#allocation2 + $0x3]]
    %s30 = sld [smem:[#allocation2 + $0x4]]
    %s31 = sld [smem:[#allocation2 + $0x5]]
    %v32 = vstv %s26
    %v33 = vmul.f32 %v32, %v24
    %v34 = vstv %s28
    %v35 = vmul.f32 %v34, %v25
    %v36 = vadd.f32 %v33, %v35
    %v37 = vstv %s29
    %v38 = vadd.f32 %v36, %v37
    %v39 = vmul.f32 %v24, %v38
    %v40 = vstv %s27
    %v41 = vmul.f32 %v40, %v25
    %v42 = vstv %s30
    %v43 = vadd.f32 %v41, %v42
    %v44 = vmul.f32 %v25, %v43
    %v45 = vadd.f32 %v39, %v44
    %v46 = vstv %s31
    %v47 = vadd.f32 %v45, %v46
    %48 = vst [vmem:[%s2] sm:$0x1] %v47
    // Predicated region
    $region14: #{mlp_forward.1} parent=1 // pred_check
      _
    $region15: #{mlp_forward.1} parent=1 // pred_check_branch
      %50 = sbr.rel (0) target = $region17
    $region16: #{mlp_forward.1} parent=1 // pred_region
      _
    $region17: #{mlp_forward.1} parent=1 // pred_fallthru
      _
    // Predicated region
    $region18: #{mlp_forward.1} parent=1 // pred_check
      _
    $region19: #{mlp_forward.1} parent=1 // pred_check_branch
      %52 = sbr.rel (0) target = $region21
    $region20: #{mlp_forward.1} parent=1 // pred_region
      _
    $region21: #{mlp_forward.1} parent=1 // pred_fallthru
      _
    %53 = vsyncpa [#allocation3], 1

</llo_original>
